<compile_context>
chip_gen: v6e
topology: v6e:2x2x1
jax: 0.10.0
libtpu: 0.0.40
codegen_flags: <defaults>
</compile_context>

<pallas_src>
import jax
import jax.numpy as jnp
from jax.experimental import pallas as pl
from jax.experimental.pallas import tpu as pltpu


def _crossnet_kernel(x_ref, w_ref, b_ref, o_ref):
    # Convert the VMEM-resident input tile to f32 ONCE; the recurrence always
    # accumulates in f32 regardless of the I/O dtype.
    x0 = x_ref[...].astype(jnp.float32)
    x = x0
    num_layers = w_ref.shape[0]
    # Static unrolled layer loop (DCN cross stacks are shallow).
    # TODO(synk): switch to lax.fori_loop(..., unroll=True) if L grows beyond ~8.
    for i in range(num_layers):
        # (1, D) slices: the VPU broadcasts over the sublane axis implicitly.
        w = w_ref[pl.ds(i, 1), :].astype(jnp.float32)
        b = b_ref[pl.ds(i, 1), :].astype(jnp.float32)
        # Lane-axis reduce runs on the XLU (slot has slack while DMAs stream).
        xw = jnp.sum(x * w, axis=-1, keepdims=True)      # (tb, 1)
        x = x0 * xw + b + x                              # full-tile VPU pass
    o_ref[...] = x.astype(o_ref.dtype)


def _round_up(n, m):
    return ((n + m - 1) // m) * m


def cross_network(x, w_stack, b_stack, *, tb=None, tile_bytes_target=4 << 20):
    """CrossNetwork forward.

    x:       (..., D)  float32 or bfloat16 (bf16 I/O halves streamed HBM bytes
             on v5e/v6e where this op is purely HBM-bound; accumulation is f32).
    w_stack: (L, D)    stacked Linear(D, 1, bias=False) weights.
    b_stack: (L, D)    stacked biases.
    tb:      optional row-tile override (rounded to sublane granularity).
    """
    orig_shape = x.shape
    D = orig_shape[-1]
    L, Dw = w_stack.shape
    assert Dw == D and b_stack.shape == (L, D)

    x2 = x.reshape(-1, D)            # rows are independent -> flatten leading axes
    B = x2.shape[0]

    itemsize = jnp.dtype(x.dtype).itemsize
    sub = 8 * (4 // itemsize)        # sublane granularity: 8 (f32) / 16 (bf16)

    # Honest per-row VMEM footprint:
    #   input tile  (double buffered): 2 * D * itemsize
    #   output tile (double buffered): 2 * D * itemsize
    #   in-kernel f32 working set (x0 + x): 2 * 4 * D
    per_row = 4 * D * itemsize + 8 * D
    p_item = jnp.dtype(w_stack.dtype).itemsize
    param_bytes = 2 * 2 * L * D * p_item          # W + B stacks, double buffered

    try:
        vmem_cap = int(pltpu.get_tpu_info().vmem_capacity_bytes)
    except Exception:
        vmem_cap = 64 << 20          # conservative: v7x per-TC VMEM
    budget = max(8 << 20, vmem_cap // 2 - param_bytes)

    if tb is None:
        # Aim for ~tile_bytes_target bytes per input buffer.
        tb = max(sub, tile_bytes_target // max(1, D * itemsize))
    tb = min(int(tb), max(sub, budget // per_row))
    tb = max(sub, (tb // sub) * sub)
    tb = min(tb, _round_up(B, sub))
    # v7x megacore: if the whole batch collapsed into a single grid step but is
    # big enough to split, halve the tile so ("parallel",) engages both TCs.
    if tb >= B and B > 2 * sub:
        tb = _round_up(pl.cdiv(B, 2), sub)

    grid = pl.cdiv(B, tb)            # partial last block: OOB reads are don't-
                                     # care (rows independent), OOB writes masked

    footprint = tb * per_row + param_bytes
    vmem_limit = int(min(vmem_cap * 3 // 4, max(32 << 20, footprint * 3 // 2)))

    out = pl.pallas_call(
        _crossnet_kernel,
        out_shape=jax.ShapeDtypeStruct((B, D), x.dtype),
        grid_spec=pltpu.PrefetchScalarGridSpec(
            num_scalar_prefetch=0,
            grid=(grid,),
            in_specs=[
                pl.BlockSpec((tb, D), lambda i: (i, 0)),   # batch tile of x
                pl.BlockSpec((L, D), lambda i: (0, 0)),    # full weight stack (VMEM-resident)
                pl.BlockSpec((L, D), lambda i: (0, 0)),    # full bias stack (VMEM-resident)
            ],
            out_specs=pl.BlockSpec((tb, D), lambda i: (i, 0)),
        ),
        compiler_params=pltpu.CompilerParams(
            dimension_semantics=("parallel",),   # batch tiles shard across TCs
            vmem_limit_bytes=vmem_limit,
        ),
    )(x2, w_stack, b_stack)

    return out.reshape(orig_shape)


def cross_network_ref(x, w_stack, b_stack):
    x0 = x
    out = x
    for i in range(w_stack.shape[0]):
        xw = jnp.sum(out * w_stack[i], axis=-1, keepdims=True)
        out = x0 * xw + b_stack[i] + out
    return out


if __name__ == "__main__":
    key = jax.random.PRNGKey(0)
    kx, kw, kb, kx3 = jax.random.split(key, 4)

    # Small, deliberately non-aligned shapes: D=96 (not a multiple of 128) and
    # B=70 (not a tile multiple) exercise the partial-block / masked-store paths.
    batch, input_dim, num_layers = 70, 96, 3
    x = jax.random.normal(kx, (batch, input_dim), dtype=jnp.float32)
    w_stack = 0.05 * jax.random.normal(kw, (num_layers, input_dim), dtype=jnp.float32)
    b_stack = 0.01 * jax.random.normal(kb, (num_layers, input_dim), dtype=jnp.float32)

    ref = cross_network_ref(x, w_stack, b_stack)

    # 2-D input, auto tile sizing (splits into 2 grid steps for megacore).
    out = jax.block_until_ready(cross_network(x, w_stack, b_stack))
    assert out.shape == (batch, input_dim)
    assert jnp.allclose(out, ref, atol=1e-4, rtol=1e-4)

    # Forced small tile -> several grid steps + a partial last block.
    out_multi = jax.block_until_ready(cross_network(x, w_stack, b_stack, tb=16))
    assert jnp.allclose(out_multi, ref, atol=1e-4, rtol=1e-4)

    # 3-D input (batch, num_fields, embed_dim) as in the module docstring.
    x3 = jax.random.normal(kx3, (4, 5, input_dim), dtype=jnp.float32)
    ref3 = cross_network_ref(x3, w_stack, b_stack)
    out3 = jax.block_until_ready(cross_network(x3, w_stack, b_stack))
    assert out3.shape == x3.shape
    assert jnp.allclose(out3, ref3, atol=1e-4, rtol=1e-4)

    # bf16 I/O (halves streamed HBM bytes on v5e/v6e); f32 accumulation inside.
    x_bf16 = x.astype(jnp.bfloat16)
    out_bf16 = jax.block_until_ready(cross_network(x_bf16, w_stack, b_stack))
    ref_bf16 = cross_network_ref(x_bf16.astype(jnp.float32), w_stack, b_stack)
    assert out_bf16.dtype == jnp.bfloat16
    assert jnp.allclose(out_bf16.astype(jnp.float32), ref_bf16, atol=5e-2, rtol=5e-2)

    print("KERNEL_OK")
</pallas_src>

<mosaic_0001>
module attributes {stable_mosaic.version = 11 : i64} {
  func.func @_crossnet_kernel(%arg0: i32, %arg1: memref<40x96xf32, #tpu.memory_space<vmem>>, %arg2: memref<3x96xf32, #tpu.memory_space<vmem>>, %arg3: memref<3x96xf32, #tpu.memory_space<vmem>>, %arg4: memref<40x96xf32, #tpu.memory_space<vmem>>) attributes {dimension_semantics = [#tpu.dimension_semantics<parallel>], iteration_bounds = array<i64: 2>, scalar_prefetch = 0 : i64, scratch_operands = 0 : i64, tpu.core_type = #tpu.core_type<tc>, window_params = [{transform_indices = @transform_0, window_bounds = array<i64: 40, 96>}, {pipeline_mode = #tpu.pipeline_mode<synchronous>, transform_indices = @transform_1, window_bounds = array<i64: 3, 96>}, {pipeline_mode = #tpu.pipeline_mode<synchronous>, transform_indices = @transform_2, window_bounds = array<i64: 3, 96>}, {transform_indices = @transform_3, window_bounds = array<i64: 40, 96>}]} {
    %c0 = arith.constant 0 : index
    %c0_0 = arith.constant 0 : index
    %0 = vector.load %arg1[%c0, %c0_0] : memref<40x96xf32, #tpu.memory_space<vmem>>, vector<40x96xf32>
    %c0_1 = arith.constant 0 : index
    %c0_2 = arith.constant 0 : index
    %1 = vector.load %arg2[%c0_1, %c0_2] : memref<3x96xf32, #tpu.memory_space<vmem>>, vector<1x96xf32>
    %c0_3 = arith.constant 0 : index
    %c0_4 = arith.constant 0 : index
    %2 = vector.load %arg3[%c0_3, %c0_4] : memref<3x96xf32, #tpu.memory_space<vmem>>, vector<1x96xf32>
    %3 = vector.broadcast %1 : vector<1x96xf32> to vector<40x96xf32>
    %4 = arith.mulf %0, %3 : vector<40x96xf32>
    %cst = arith.constant dense<0.000000e+00> : vector<40xf32>
    %5 = vector.multi_reduction <add>, %4, %cst [1] : vector<40x96xf32> to vector<40xf32>
    %6 = vector.shape_cast %5 : vector<40xf32> to vector<40x1xf32>
    %7 = vector.broadcast %6 : vector<40x1xf32> to vector<40x96xf32>
    %8 = arith.mulf %0, %7 : vector<40x96xf32>
    %9 = vector.broadcast %2 : vector<1x96xf32> to vector<40x96xf32>
    %10 = arith.addf %8, %9 : vector<40x96xf32>
    %11 = arith.addf %10, %0 : vector<40x96xf32>
    %c1 = arith.constant 1 : index
    %c0_5 = arith.constant 0 : index
    %12 = vector.load %arg2[%c1, %c0_5] : memref<3x96xf32, #tpu.memory_space<vmem>>, vector<1x96xf32>
    %c1_6 = arith.constant 1 : index
    %c0_7 = arith.constant 0 : index
    %13 = vector.load %arg3[%c1_6, %c0_7] : memref<3x96xf32, #tpu.memory_space<vmem>>, vector<1x96xf32>
    %14 = vector.broadcast %12 : vector<1x96xf32> to vector<40x96xf32>
    %15 = arith.mulf %11, %14 : vector<40x96xf32>
    %cst_8 = arith.constant dense<0.000000e+00> : vector<40xf32>
    %16 = vector.multi_reduction <add>, %15, %cst_8 [1] : vector<40x96xf32> to vector<40xf32>
    %17 = vector.shape_cast %16 : vector<40xf32> to vector<40x1xf32>
    %18 = vector.broadcast %17 : vector<40x1xf32> to vector<40x96xf32>
    %19 = arith.mulf %0, %18 : vector<40x96xf32>
    %20 = vector.broadcast %13 : vector<1x96xf32> to vector<40x96xf32>
    %21 = arith.addf %19, %20 : vector<40x96xf32>
    %22 = arith.addf %21, %11 : vector<40x96xf32>
    %c2 = arith.constant 2 : index
    %c0_9 = arith.constant 0 : index
    %23 = vector.load %arg2[%c2, %c0_9] : memref<3x96xf32, #tpu.memory_space<vmem>>, vector<1x96xf32>
    %c2_10 = arith.constant 2 : index
    %c0_11 = arith.constant 0 : index
    %24 = vector.load %arg3[%c2_10, %c0_11] : memref<3x96xf32, #tpu.memory_space<vmem>>, vector<1x96xf32>
    %25 = vector.broadcast %23 : vector<1x96xf32> to vector<40x96xf32>
    %26 = arith.mulf %22, %25 : vector<40x96xf32>
    %cst_12 = arith.constant dense<0.000000e+00> : vector<40xf32>
    %27 = vector.multi_reduction <add>, %26, %cst_12 [1] : vector<40x96xf32> to vector<40xf32>
    %28 = vector.shape_cast %27 : vector<40xf32> to vector<40x1xf32>
    %29 = vector.broadcast %28 : vector<40x1xf32> to vector<40x96xf32>
    %30 = arith.mulf %0, %29 : vector<40x96xf32>
    %31 = vector.broadcast %24 : vector<1x96xf32> to vector<40x96xf32>
    %32 = arith.addf %30, %31 : vector<40x96xf32>
    %33 = arith.addf %32, %22 : vector<40x96xf32>
    %c0_13 = arith.constant 0 : index
    %c0_14 = arith.constant 0 : index
    %34 = vector.load %arg4[%c0_13, %c0_14] : memref<40x96xf32, #tpu.memory_space<vmem>>, vector<40x96xf32>
    tpu.vector_store %arg4[%c0_13, %c0_14], %33 {strides = array<i32>} : memref<40x96xf32, #tpu.memory_space<vmem>>, vector<40x96xf32>,
    return
  }
  func.func @transform_0(%arg0: i32) -> (i32, i32) {
    %c0_i32 = arith.constant 0 : i32
    %c0_i32_0 = arith.constant 0 : i32
    return %arg0, %c0_i32 : i32, i32
  }
  func.func @transform_1(%arg0: i32) -> (i32, i32) {
    %c0_i32 = arith.constant 0 : i32
    %c0_i32_0 = arith.constant 0 : i32
    %c0_i32_1 = arith.constant 0 : i32
    return %c0_i32, %c0_i32_0 : i32, i32
  }
  func.func @transform_2(%arg0: i32) -> (i32, i32) {
    %c0_i32 = arith.constant 0 : i32
    %c0_i32_0 = arith.constant 0 : i32
    %c0_i32_1 = arith.constant 0 : i32
    return %c0_i32, %c0_i32_0 : i32, i32
  }
  func.func @transform_3(%arg0: i32) -> (i32, i32) {
    %c0_i32 = arith.constant 0 : i32
    %c0_i32_0 = arith.constant 0 : i32
    return %arg0, %c0_i32 : i32, i32
  }
}

</mosaic_0001>

<llo_original>
// kernel: tpu_custom_call.1
$region0: #{tpu_custom_call.1}
  #allocation0 [shape = 'u32[]', space=smem, size = 0x4, offset = 0x4, fixed_abs, tag = 'smem constant byte address 0x4 - core index']
  #allocation1 [shape = 'u32[144,128]{1,0:T(1,128)}', space=vmem, size = 0x12000, scoped, tag = 'internal scratch']
  %s0 = inlined_call_operand.hbm [shape: f32[70,96], index: 0, kind: input, shape index: {}]
  %s1 = inlined_call_operand.hbm [shape: f32[3,96], index: 1, kind: input, shape index: {}]
  %s2 = inlined_call_operand.hbm [shape: f32[3,96], index: 2, kind: input, shape index: {}]
  %s3 = inlined_call_operand.hbm [shape: f32[70,96], index: 3, kind: output, shape index: {}]
  %s4 = sld [smem:[#allocation0]]
  $region57: #{tpu_custom_call.1} parent=0
    _
  %s6 = ssub.s32 1, %s4
  %s7 = scalar_select 0, %s6, %s4
  $region1: #{tpu_custom_call.1} parent=0
    #allocation2 [shape = 'u8[40960]{0}', space=vmem, size = 0xa000, scoped, tag = 'input window, operand 0']
    #allocation3 [shape = 's32[2]{0}', space=sflag, size = 0x8, scoped, tag = 'scoped memory for tpu_custom_call.1']
    #allocation4 [shape = 's32[2]{0}', space=sflag, size = 0x8, scoped, tag = 'scoped memory for tpu_custom_call.1']
    #allocation5 [shape = 'u8[2048]{0}', space=vmem, size = 0x800, scoped, tag = 'input window, operand 1, single buffered']
    #allocation6 [shape = 's32[1]{0}', space=sflag, size = 0x4, scoped, tag = 'scoped memory for tpu_custom_call.1']
    #allocation7 [shape = 'u8[2048]{0}', space=vmem, size = 0x800, scoped, tag = 'input window, operand 2, single buffered']
    #allocation8 [shape = 'u8[40960]{0}', space=vmem, size = 0xa000, scoped, tag = 'output window, operand 0']
    %8 = vsyncpa [#allocation3], 0
    %s9 = scalar_lea.sflag [#allocation3], 1
    %10 = vsyncpa %s9, 0
    %11 = vsyncpa [#allocation6], 0
    %12 = vsyncpa [#allocation4], 0
    %s13 = scalar_lea.sflag [#allocation4], 1
    %14 = vsyncpa %s13, 0
    loop: start=0, step=1, limit=4
    $region2: #{tpu_custom_call.1} parent=1 // loop_pre_header
      _
    $region3: #{tpu_custom_call.1} parent=1 // loop_header
      %s16 = sphi 0, %s20
      %p17 = scmp.ge.s32.totalorder %s16, 4
      %s26 = sphi 0, %s28
      %s29 = sphi 0, %s26
      %s30 = sphi 0, %s29
      %s46 = sphi 0, %s30
      %s50 = sphi 0, %s50
      %s52 = sphi 0, %s50
      %s53 = sphi 0, %s52
      %s67 = sphi 0, %s53
      %s71 = sphi 0, %s71
      %s73 = sphi 0, %s71
      %s74 = sphi 0, %s73
      %s88 = sphi 0, %s74
      %s94 = sphi 0, %s96
      %s97 = sphi 0, %s94
      %s98 = sphi 0, %s97
      %s114 = sphi 0, %s98
    $region4: #{tpu_custom_call.1} parent=1 // loop_header_branch
      %19 = sbr.rel (%p17) target = $region8
    $region5: #{tpu_custom_call.1} parent=1 // loop_body
      %s21 = ssub.s32 %s16, 1
      %s22 = ssub.s32 %s16, 2
      %s23 = sadd.s32 %s16, 1
      %s24 = ssub.s32 %s16, %s23
      %p25 = scmp.eq.s32.totalorder %s24, 0
      %s27 = sadd.s32 %s26, 1
      %s28 = scalar_select %p25, %s26, %s27
      %p31 = pneg %p25
      %p32 = scmp.eq.s32.totalorder %s16, 1
      %p33 = por %p31, %p32
      %p34 = scmp.ne.s32.totalorder %s26, %s29
      %p35 = scmp.eq.s32.totalorder %s16, 0
      %p36 = por %p34, %p35
      %p37 = scmp.ne.s32.totalorder %s26, %s29
      %p38 = scmp.eq.s32.totalorder %s21, 1
      %p39 = por %p37, %p38
      %p40 = scmp.ne.s32.totalorder %s29, %s30
      %p41 = scmp.eq.s32.totalorder %s21, 0
      %p42 = por %p40, %p41
      %p43 = scmp.ne.s32.totalorder %s29, %s30
      %p44 = scmp.eq.s32.totalorder %s22, 1
      %p45 = por %p43, %p44
      %p47 = scmp.ne.s32.totalorder %s30, %s46
      %p48 = scmp.eq.s32.totalorder %s22, 0
      %p49 = por %p47, %p48
      %s51 = sadd.s32 %s50, 1
      %p54 = scmp.eq.s32.totalorder %s16, 1
      %p55 = scmp.ne.s32.totalorder %s50, %s52
      %p56 = scmp.eq.s32.totalorder %s16, 0
      %p57 = por %p55, %p56
      %p58 = scmp.ne.s32.totalorder %s50, %s52
      %p59 = scmp.eq.s32.totalorder %s21, 1
      %p60 = por %p58, %p59
      %p61 = scmp.ne.s32.totalorder %s52, %s53
      %p62 = scmp.eq.s32.totalorder %s21, 0
      %p63 = por %p61, %p62
      %p64 = scmp.ne.s32.totalorder %s52, %s53
      %p65 = scmp.eq.s32.totalorder %s22, 1
      %p66 = por %p64, %p65
      %p68 = scmp.ne.s32.totalorder %s53, %s67
      %p69 = scmp.eq.s32.totalorder %s22, 0
      %p70 = por %p68, %p69
      %s72 = sadd.s32 %s71, 1
      %p75 = scmp.eq.s32.totalorder %s16, 1
      %p76 = scmp.ne.s32.totalorder %s71, %s73
      %p77 = scmp.eq.s32.totalorder %s16, 0
      %p78 = por %p76, %p77
      %p79 = scmp.ne.s32.totalorder %s71, %s73
      %p80 = scmp.eq.s32.totalorder %s21, 1
      %p81 = por %p79, %p80
      %p82 = scmp.ne.s32.totalorder %s73, %s74
      %p83 = scmp.eq.s32.totalorder %s21, 0
      %p84 = por %p82, %p83
      %p85 = scmp.ne.s32.totalorder %s73, %s74
      %p86 = scmp.eq.s32.totalorder %s22, 1
      %p87 = por %p85, %p86
      %p89 = scmp.ne.s32.totalorder %s74, %s88
      %p90 = scmp.eq.s32.totalorder %s22, 0
      %p91 = por %p89, %p90
      %s92 = ssub.s32 %s16, %s23
      %p93 = scmp.eq.s32.totalorder %s92, 0
      %s95 = sadd.s32 %s94, 1
      %s96 = scalar_select %p93, %s94, %s95
      %p99 = pneg %p93
      %p100 = scmp.eq.s32.totalorder %s16, 1
      %p101 = por %p99, %p100
      %p102 = scmp.ne.s32.totalorder %s94, %s97
      %p103 = scmp.eq.s32.totalorder %s16, 0
      %p104 = por %p102, %p103
      %p105 = scmp.ne.s32.totalorder %s94, %s97
      %p106 = scmp.eq.s32.totalorder %s21, 1
      %p107 = por %p105, %p106
      %p108 = scmp.ne.s32.totalorder %s97, %s98
      %p109 = scmp.eq.s32.totalorder %s21, 0
      %p110 = por %p108, %p109
      %p111 = scmp.ne.s32.totalorder %s97, %s98
      %p112 = scmp.eq.s32.totalorder %s22, 1
      %p113 = por %p111, %p112
      %p115 = scmp.ne.s32.totalorder %s98, %s114
      %p116 = scmp.eq.s32.totalorder %s22, 0
      %p117 = por %p115, %p116
      %p118 = scmp.le.s32.totalorder 1, %s16
      %p119 = scmp.lt.s32.totalorder %s16, 3
      %p120 = pnand %p118, %p119
      %p121 = pneg %p120
      // Predicated region
      $region9: #{tpu_custom_call.1} parent=5 // pred_check
        _
      $region10: #{tpu_custom_call.1} parent=5 // pred_check_branch
        %123 = sbr.rel (%p120) target = $region12
      $region11: #{tpu_custom_call.1} parent=5 // pred_region
        %s124 = ssub.s32 %s16, 1
        // Predicated region
        $region13: #{tpu_custom_call.1} parent=11 // pred_check
          %p125 = pneg %p63
        $region14: #{tpu_custom_call.1} parent=11 // pred_check_branch
          %127 = sbr.rel (%p125) target = $region16
        $region15: #{tpu_custom_call.1} parent=11 // pred_region
          %s129 = ssub.s32 64, 64
          %130 = vsyncadd [#allocation6], %s129
          %s132 = sshll.u32 [#allocation5], 4
          %s133 = int_to_ptr.vmem [resolvable:$true] %s132
          %135 = dma.hbm_to_vmem [thread:$0]  %s1, 64, %s133, [#allocation6]
        $region16: #{tpu_custom_call.1} parent=11 // pred_fallthru
          _
        // Predicated region
        $region17: #{tpu_custom_call.1} parent=11 // pred_check
          %p136 = pneg %p84
        $region18: #{tpu_custom_call.1} parent=11 // pred_check_branch
          %138 = sbr.rel (%p136) target = $region20
        $region19: #{tpu_custom_call.1} parent=11 // pred_region
          %s140 = ssub.s32 64, 64
          %141 = vsyncadd [#allocation6], %s140
          %s143 = sshll.u32 [#allocation7], 4
          %s144 = int_to_ptr.vmem [resolvable:$true] %s143
          %146 = dma.hbm_to_vmem [thread:$0]  %s2, 64, %s144, [#allocation6]
        $region20: #{tpu_custom_call.1} parent=11 // pred_fallthru
          _
      $region12: #{tpu_custom_call.1} parent=5 // pred_fallthru
        _
      %p147 = scmp.lt.s32.totalorder %s16, 2
      // Predicated region
      $region21: #{tpu_custom_call.1} parent=5 // pred_check
        %p148 = pneg %p147
      $region22: #{tpu_custom_call.1} parent=5 // pred_check_branch
        %150 = sbr.rel (%p148) target = $region24
      $region23: #{tpu_custom_call.1} parent=5 // pred_region
        // Predicated region
        $region25: #{tpu_custom_call.1} parent=23 // pred_check
          %p151 = pneg %p36
        $region26: #{tpu_custom_call.1} parent=23 // pred_check_branch
          %153 = sbr.rel (%p151) target = $region28
        $region27: #{tpu_custom_call.1} parent=23 // pred_region
          %s154 = sand.u32 %s26, 1
          %s155 = scalar_lea.sflag [#allocation3], %s154
          %s156 = sand.u32 %s26, 1
          %s157 = smul.addr %s156, 40
          %s158 = scalar_lea.vmem [#allocation2], %s157
          %s159 = smul.u32 5, %s16
          %s160 = ssub.s32 9, %s159
          %p161 = scmp.lt.s32.totalorder %s160, 5
          %s162 = scalar_select %p161, %s160, 5
          %s163 = smul.u32 128, %s162
          %s165 = ssub.s32 640, %s163
          %166 = vsyncadd %s155, %s165
          %p167 = scmp.ne.s32.totalorder 0, %s163
          %s168 = smul.addr %s159, 128
          %s169 = scalar_lea.hbm %s0, %s168
          %s170 = smul.u32 8, %s162
          %s171 = sshll.u32 %s158, 4
          %s172 = int_to_ptr.vmem [resolvable:$true] %s171
          %s173 = sshll.u32 %s170, 4
          %177 = dma.hbm_to_vmem [thread:$0]  (%p167), %s169, %s173, %s172, %s155, 128, 128, 8
        $region28: #{tpu_custom_call.1} parent=23 // pred_fallthru
          _
      $region24: #{tpu_custom_call.1} parent=5 // pred_fallthru
        _
      %p178 = scmp.le.s32.totalorder 1, %s16
      %p179 = scmp.lt.s32.totalorder %s16, 3
      %p180 = pnand %p178, %p179
      %p181 = pneg %p180
      // Predicated region
      $region29: #{tpu_custom_call.1} parent=5 // pred_check
        _
      $region30: #{tpu_custom_call.1} parent=5 // pred_check_branch
        %183 = sbr.rel (%p180) target = $region32
      $region31: #{tpu_custom_call.1} parent=5 // pred_region
        %s184 = ssub.s32 %s16, 1
        %s185 = sand.u32 %s29, 1
        %s186 = scalar_lea.sflag [#allocation3], %s185
        %s187 = sand.u32 %s29, 1
        %s188 = smul.addr %s187, 40
        %s189 = scalar_lea.vmem [#allocation2], %s188
        // Predicated region
        $region33: #{tpu_custom_call.1} parent=31 // pred_check
          %p190 = pneg %p42
        $region34: #{tpu_custom_call.1} parent=31 // pred_check_branch
          %192 = sbr.rel (%p190) target = $region36
        $region35: #{tpu_custom_call.1} parent=31 // pred_region
          %193 = dma.done %s186, 640
        $region36: #{tpu_custom_call.1} parent=31 // pred_fallthru
          _
        // Predicated region
        $region37: #{tpu_custom_call.1} parent=31 // pred_check
          %p194 = pneg %p63
        $region38: #{tpu_custom_call.1} parent=31 // pred_check_branch
          %196 = sbr.rel (%p194) target = $region40
        $region39: #{tpu_custom_call.1} parent=31 // pred_region
          %197 = dma.done [#allocation6], 64
        $region40: #{tpu_custom_call.1} parent=31 // pred_fallthru
          _
        // Predicated region
        $region41: #{tpu_custom_call.1} parent=31 // pred_check
          %p198 = pneg %p84
        $region42: #{tpu_custom_call.1} parent=31 // pred_check_branch
          %200 = sbr.rel (%p198) target = $region44
        $region43: #{tpu_custom_call.1} parent=31 // pred_region
          %201 = dma.done [#allocation6], 64
        $region44: #{tpu_custom_call.1} parent=31 // pred_fallthru
          _
        %s202 = sand.u32 %s29, 1
        %s203 = scalar_lea.sflag [#allocation3], %s202
        %s204 = sand.u32 %s29, 1
        %s205 = smul.addr %s204, 40
        %s206 = scalar_lea.vmem [#allocation2], %s205
        %p207 = pneg %p42
        %p208 = pneg %p39
        %p209 = pneg %p63
        %p210 = pneg %p60
        %p211 = pneg %p84
        %p212 = pneg %p81
        %p213 = pneg %p110
        %p214 = pneg %p107
        %s215 = sand.u32 %s97, 1
        %s216 = scalar_lea.sflag [#allocation4], %s215
        %s217 = sand.u32 %s97, 1
        %s218 = smul.addr %s217, 40
        %s219 = scalar_lea.vmem [#allocation8], %s218
        %s220 = smul.u32 5, %s21
        %s221 = ssub.s32 9, %s220
        %p222 = scmp.lt.s32.totalorder %s221, 5
        %s223 = scalar_select %p222, %s221, 5
        %s224 = smul.u32 128, %s223
        %s225 = smul.u32 5, %s21
        %s226 = ssub.s32 9, %s225
        %p227 = scmp.lt.s32.totalorder %s226, 5
        %s228 = scalar_select %p227, %s226, 5
        %s229 = smul.u32 128, %s228
        %v230 = vld [vmem:[%s189] sm:$0xff]
        %v231 = vld [vmem:[%s189 + $0x8] sm:$0xff]
        %v232 = vld [vmem:[%s189 + $0x10] sm:$0xff]
        %v233 = vld [vmem:[%s189 + $0x18] sm:$0xff]
        %v234 = vld [vmem:[%s189 + $0x20] sm:$0xff]
        %v235 = vld [vmem:[#allocation5] sm:$0x1]
        %v236 = vld [vmem:[#allocation7] sm:$0x1]
        %v237 = vlaneseq
        %v238 = vshrl.u32 %v237, 7
        %v239 = vsub.s32 0, %v238
        %v240 = vrot.slane %v235, %v239
        %v241 = vmul.f32 %v230, %v240
        %v242 = vmul.f32 %v231, %v240
        %v243 = vmul.f32 %v232, %v240
        %v244 = vmul.f32 %v233, %v240
        %v245 = vmul.f32 %v234, %v240
        %vm246 = vcmask 785408
        %v247 = vsel %vm246, %v241, 0.0
        %248 = vadd.xlane.f32.xlu0 %v247
        %v249 = vpop.xlane.xlu0 %248
        %v250 = vsel %vm246, %v242, 0.0
        %251 = vadd.xlane.f32.xlu0 %v250
        %v252 = vpop.xlane.xlu0 %251
        %v253 = vsel %vm246, %v243, 0.0
        %254 = vadd.xlane.f32.xlu0 %v253
        %v255 = vpop.xlane.xlu0 %254
        %v256 = vsel %vm246, %v244, 0.0
        %257 = vadd.xlane.f32.xlu0 %v256
        %v258 = vpop.xlane.xlu0 %257
        %v259 = vsel %vm246, %v245, 0.0
        %260 = vadd.xlane.f32.xlu0 %v259
        %v261 = vpop.xlane.xlu0 %260
        %v262 = vmul.f32 %v230, %v249
        %v263 = vmul.f32 %v231, %v252
        %v264 = vmul.f32 %v232, %v255
        %v265 = vmul.f32 %v233, %v258
        %v266 = vmul.f32 %v234, %v261
        %v267 = vlaneseq
        %v268 = vshrl.u32 %v267, 7
        %v269 = vsub.s32 0, %v268
        %v270 = vrot.slane %v236, %v269
        %v271 = vadd.f32 %v262, %v270
        %v272 = vadd.f32 %v263, %v270
        %v273 = vadd.f32 %v264, %v270
        %v274 = vadd.f32 %v265, %v270
        %v275 = vadd.f32 %v266, %v270
        %v276 = vadd.f32 %v271, %v230
        %v277 = vadd.f32 %v272, %v231
        %v278 = vadd.f32 %v273, %v232
        %v279 = vadd.f32 %v274, %v233
        %v280 = vadd.f32 %v275, %v234
        %v281 = vld [vmem:[#allocation5 + $0x1] sm:$0x1]
        %v282 = vld [vmem:[#allocation7 + $0x1] sm:$0x1]
        %v283 = vlaneseq
        %v284 = vshrl.u32 %v283, 7
        %v285 = vsub.s32 0, %v284
        %v286 = vrot.slane %v281, %v285
        %v287 = vmul.f32 %v276, %v286
        %v288 = vmul.f32 %v277, %v286
        %v289 = vmul.f32 %v278, %v286
        %v290 = vmul.f32 %v279, %v286
        %v291 = vmul.f32 %v280, %v286
        %v292 = vsel %vm246, %v287, 0.0
        %293 = vadd.xlane.f32.xlu0 %v292
        %v294 = vpop.xlane.xlu0 %293
        %v295 = vsel %vm246, %v288, 0.0
        %296 = vadd.xlane.f32.xlu0 %v295
        %v297 = vpop.xlane.xlu0 %296
        %v298 = vsel %vm246, %v289, 0.0
        %299 = vadd.xlane.f32.xlu0 %v298
        %v300 = vpop.xlane.xlu0 %299
        %v301 = vsel %vm246, %v290, 0.0
        %302 = vadd.xlane.f32.xlu0 %v301
        %v303 = vpop.xlane.xlu0 %302
        %v304 = vsel %vm246, %v291, 0.0
        %305 = vadd.xlane.f32.xlu0 %v304
        %v306 = vpop.xlane.xlu0 %305
        %v307 = vmul.f32 %v230, %v294
        %v308 = vmul.f32 %v231, %v297
        %v309 = vmul.f32 %v232, %v300
        %v310 = vmul.f32 %v233, %v303
        %v311 = vmul.f32 %v234, %v306
        %v312 = vlaneseq
        %v313 = vshrl.u32 %v312, 7
        %v314 = vsub.s32 0, %v313
        %v315 = vrot.slane %v282, %v314
        %v316 = vadd.f32 %v307, %v315
        %v317 = vadd.f32 %v308, %v315
        %v318 = vadd.f32 %v309, %v315
        %v319 = vadd.f32 %v310, %v315
        %v320 = vadd.f32 %v311, %v315
        %v321 = vadd.f32 %v316, %v276
        %v322 = vadd.f32 %v317, %v277
        %v323 = vadd.f32 %v318, %v278
        %v324 = vadd.f32 %v319, %v279
        %v325 = vadd.f32 %v320, %v280
        %v326 = vld [vmem:[#allocation5 + $0x2] sm:$0x1]
        %v327 = vld [vmem:[#allocation7 + $0x2] sm:$0x1]
        %v328 = vlaneseq
        %v329 = vshrl.u32 %v328, 7
        %v330 = vsub.s32 0, %v329
        %v331 = vrot.slane %v326, %v330
        %v332 = vmul.f32 %v321, %v331
        %v333 = vmul.f32 %v322, %v331
        %v334 = vmul.f32 %v323, %v331
        %v335 = vmul.f32 %v324, %v331
        %v336 = vmul.f32 %v325, %v331
        %v337 = vsel %vm246, %v332, 0.0
        %338 = vadd.xlane.f32.xlu0 %v337
        %v339 = vpop.xlane.xlu0 %338
        %v340 = vsel %vm246, %v333, 0.0
        %341 = vadd.xlane.f32.xlu0 %v340
        %v342 = vpop.xlane.xlu0 %341
        %v343 = vsel %vm246, %v334, 0.0
        %344 = vadd.xlane.f32.xlu0 %v343
        %v345 = vpop.xlane.xlu0 %344
        %v346 = vsel %vm246, %v335, 0.0
        %347 = vadd.xlane.f32.xlu0 %v346
        %v348 = vpop.xlane.xlu0 %347
        %v349 = vsel %vm246, %v336, 0.0
        %350 = vadd.xlane.f32.xlu0 %v349
        %v351 = vpop.xlane.xlu0 %350
        %v352 = vmul.f32 %v230, %v339
        %v353 = vmul.f32 %v231, %v342
        %v354 = vmul.f32 %v232, %v345
        %v355 = vmul.f32 %v233, %v348
        %v356 = vmul.f32 %v234, %v351
        %v357 = vlaneseq
        %v358 = vshrl.u32 %v357, 7
        %v359 = vsub.s32 0, %v358
        %v360 = vrot.slane %v327, %v359
        %v361 = vadd.f32 %v352, %v360
        %v362 = vadd.f32 %v353, %v360
        %v363 = vadd.f32 %v354, %v360
        %v364 = vadd.f32 %v355, %v360
        %v365 = vadd.f32 %v356, %v360
        %v366 = vadd.f32 %v361, %v321
        %v367 = vadd.f32 %v362, %v322
        %v368 = vadd.f32 %v363, %v323
        %v369 = vadd.f32 %v364, %v324
        %v370 = vadd.f32 %v365, %v325
        %371 = vst.msk [vmem:[%s219] sm:$0xff] %vm246, %v366
        %372 = vst.msk [vmem:[%s219 + $0x8] sm:$0xff] %vm246, %v367
        %373 = vst.msk [vmem:[%s219 + $0x10] sm:$0xff] %vm246, %v368
        %374 = vst.msk [vmem:[%s219 + $0x18] sm:$0xff] %vm246, %v369
        %375 = vst.msk [vmem:[%s219 + $0x20] sm:$0xff] %vm246, %v370
        %s376 = sand.u32 %s97, 1
        %s377 = scalar_lea.sflag [#allocation4], %s376
        %s378 = sand.u32 %s97, 1
        %s379 = smul.addr %s378, 40
        %s380 = scalar_lea.vmem [#allocation8], %s379
        // Predicated region
        $region45: #{tpu_custom_call.1} parent=31 // pred_check
          %p381 = pneg %p107
        $region46: #{tpu_custom_call.1} parent=31 // pred_check_branch
          %383 = sbr.rel (%p381) target = $region48
        $region47: #{tpu_custom_call.1} parent=31 // pred_region
          %s384 = smul.u32 5, %s21
          %s385 = ssub.s32 9, %s384
          %p386 = scmp.lt.s32.totalorder %s385, 5
          %s387 = scalar_select %p386, %s385, 5
          %s388 = smul.u32 128, %s387
          %s390 = ssub.s32 640, %s388
          %391 = vsyncadd %s377, %s390
          %p392 = scmp.ne.s32.totalorder 0, %s388
          %s393 = smul.addr %s384, 128
          %s394 = scalar_lea.hbm %s3, %s393
          %s395 = smul.u32 8, %s387
          %s396 = sshll.u32 %s380, 4
          %s397 = int_to_ptr.vmem [resolvable:$true] %s396
          %s398 = sshll.u32 %s395, 4
          %402 = dma.vmem_to_hbm [thread:$0]  (%p392), %s397, %s398, %s394, %s377, 128, 128, 8
        $region48: #{tpu_custom_call.1} parent=31 // pred_fallthru
          _
      $region32: #{tpu_custom_call.1} parent=5 // pred_fallthru
        _
      %p403 = scmp.le.s32.totalorder 2, %s16
      // Predicated region
      $region49: #{tpu_custom_call.1} parent=5 // pred_check
        %p404 = pneg %p403
      $region50: #{tpu_custom_call.1} parent=5 // pred_check_branch
        %406 = sbr.rel (%p404) target = $region52
      $region51: #{tpu_custom_call.1} parent=5 // pred_region
        %s407 = ssub.s32 %s16, 2
        // Predicated region
        $region53: #{tpu_custom_call.1} parent=51 // pred_check
          %p408 = pneg %p113
        $region54: #{tpu_custom_call.1} parent=51 // pred_check_branch
          %410 = sbr.rel (%p408) target = $region56
        $region55: #{tpu_custom_call.1} parent=51 // pred_region
          %s411 = sand.u32 %s98, 1
          %s412 = scalar_lea.sflag [#allocation4], %s411
          %s413 = sand.u32 %s98, 1
          %s414 = smul.addr %s413, 40
          %s415 = scalar_lea.vmem [#allocation8], %s414
          %416 = dma.done %s412, 640
        $region56: #{tpu_custom_call.1} parent=51 // pred_fallthru
          _
      $region52: #{tpu_custom_call.1} parent=5 // pred_fallthru
        _
    $region6: #{tpu_custom_call.1} parent=1 // loop_footer
      %s20 = sadd.s32 1, %s16
    $region7: #{tpu_custom_call.1} parent=1 // loop_footer_branch
      %15 = sbr.rel target = $region3
    $region8: #{tpu_custom_call.1} parent=1 // loop_exit
      _
    %417 = vsyncpa [#allocation3], 1
    %s418 = scalar_lea.sflag [#allocation3], 1
    %419 = vsyncpa %s418, 1
    %420 = vsyncpa [#allocation6], 1
    %421 = vsyncpa [#allocation4], 1
    %s422 = scalar_lea.sflag [#allocation4], 1
    %423 = vsyncpa %s422, 1

</llo_original>
